<compile_context>
chip_gen: v5e
topology: v5e:2x2
jax: 0.10.0
libtpu: 0.0.40
codegen_flags: <defaults>
</compile_context>

<pallas_src>
import functools

import jax
import jax.numpy as jnp
from jax.experimental import pallas as pl
from jax.experimental.pallas import tpu as pltpu


def _round_up(a, b):
    return (a + b - 1) // b * b


def _weighted_ce_kernel(x_ref, t_ref, wi_ref, out_ref, num_ref, den_ref):
    # x_ref:   (C, TILE_N)  logits (native dtype), class axis on sublanes
    # t_ref:   (1, TILE_N)  int32 targets (-1 for padded columns)
    # wi_ref:  (1, TILE_N)  f32 per-sample weight w[target] (0 for padding)
    # out_ref: (1, 2)       f32 SMEM partial [num, den] for this outer group
    # num_ref: (1, TILE_N)  f32 VMEM per-lane numerator accumulator
    # den_ref: (1, TILE_N)  f32 VMEM per-lane denominator accumulator
    i = pl.program_id(1)

    @pl.when(i == 0)
    def _init():
        num_ref[...] = jnp.zeros_like(num_ref)
        den_ref[...] = jnp.zeros_like(den_ref)

    x = x_ref[...].astype(jnp.float32)      # (C, TILE_N)
    t = t_ref[...]                          # (1, TILE_N) int32
    wi = wi_ref[...]                        # (1, TILE_N) f32

    # selection mask built in-kernel (no one-hot DMA); padded rows (t = -1)
    # match no class.
    cls_id = jax.lax.broadcasted_iota(jnp.int32, x.shape, 0)   # (C, TILE_N)
    mask = cls_id == t                                          # (C, TILE_N)

    # numerically stable log-sum-exp over the (short) sublane class axis
    m = jnp.max(x, axis=0, keepdims=True)                       # (1, TILE_N)
    lse = jnp.log(jnp.sum(jnp.exp(x - m), axis=0, keepdims=True)) + m

    # target logit via masked reduction (NaN-safe)
    xt = jnp.sum(jnp.where(mask, x, 0.0), axis=0, keepdims=True)

    nll = lse - xt                                              # per-sample CE

    # streaming per-lane partial sums; final reduce deferred to last step
    num_ref[...] += wi * nll
    den_ref[...] += wi

    @pl.when(i == pl.num_programs(1) - 1)
    def _finalize():
        out_ref[0, 0] = jnp.sum(num_ref[...])
        out_ref[0, 1] = jnp.sum(den_ref[...])


@functools.partial(jax.jit, static_argnames=("tile_n",))
def weighted_cross_entropy(x, target, per_cls_weight, tile_n=None):
    """x: (N, C) float logits (f32 or bf16), target: (N,) int, weight: (C,)."""
    N, C = x.shape
    itemsize = jnp.dtype(x.dtype).itemsize
    c_sub = _round_up(C, 8)            # sublane-padded class count in VMEM

    # Generation-aware VMEM capacity (v5e/v6e 128 MiB, v7x 64 MiB per TC).
    try:
        vmem_cap = int(pltpu.get_tpu_info().vmem_capacity_bytes)
    except Exception:
        vmem_cap = 64 * 1024 * 1024    # conservative (v7x per-TC)

    if tile_n is None:
        # Aim for ~1-4 MiB per logits buffer (double-buffered by BlockSpec),
        # capped by a fraction of physical VMEM.
        target_block_bytes = min(4 << 20, max(1 << 20, vmem_cap // 8))
        ideal = target_block_bytes // max(c_sub * itemsize, 1)
        tile_n = max(256, min(8192, (ideal // 128) * 128))
    tile_n = max(128, (int(tile_n) // 128) * 128)
    tile_n = min(tile_n, max(128, _round_up(N, 128)))

    n_tiles = pl.cdiv(N, tile_n)
    n_outer = 2 if n_tiles >= 2 else 1      # dual-TC partial sums on v7x
    n_tiles = _round_up(n_tiles, n_outer)
    n_inner = n_tiles // n_outer
    n_pad = n_tiles * tile_n

    target = target.astype(jnp.int32)
    if n_pad != N:
        x = jnp.pad(x, ((0, n_pad - N), (0, 0)))
        target = jnp.pad(target, (0, n_pad - N), constant_values=-1)

    # Host-side per-sample weight gather (replaces an in-kernel full-tile pass).
    w = per_cls_weight.astype(jnp.float32)
    wi = jnp.where(target >= 0, w[jnp.maximum(target, 0)], 0.0)

    x_t = x.T                                   # (C, n_pad) lane-dense layout
    t2 = target.reshape(1, n_pad)
    wi2 = wi.reshape(1, n_pad).astype(jnp.float32)

    # Explicit scoped-VMEM limit sized to the double-buffered stream + headroom.
    x_block = c_sub * tile_n * itemsize
    aux_block = 8 * tile_n * 4                  # (1, tile_n) padded to 8 sublanes
    vmem_need = 2 * x_block + 4 * aux_block + 2 * aux_block + (2 << 20)
    vmem_limit = int(min(vmem_cap, max(vmem_need, 16 << 20)))

    cost = pl.CostEstimate(
        flops=6 * n_pad * C,
        transcendentals=n_pad * C + n_pad,
        bytes_accessed=n_pad * C * itemsize + n_pad * 8 + C * 4 + n_outer * 8,
    )

    partials = pl.pallas_call(
        _weighted_ce_kernel,
        out_shape=jax.ShapeDtypeStruct((n_outer, 2), jnp.float32),
        grid_spec=pltpu.PrefetchScalarGridSpec(
            num_scalar_prefetch=0,
            grid=(n_outer, n_inner),
            in_specs=[
                pl.BlockSpec((C, tile_n), lambda g, i: (0, g * n_inner + i)),
                pl.BlockSpec((1, tile_n), lambda g, i: (0, g * n_inner + i)),
                pl.BlockSpec((1, tile_n), lambda g, i: (0, g * n_inner + i)),
            ],
            out_specs=pl.BlockSpec((1, 2), lambda g, i: (g, 0),
                                   memory_space=pltpu.MemorySpace.SMEM),
            scratch_shapes=[pltpu.VMEM((1, tile_n), jnp.float32),
                            pltpu.VMEM((1, tile_n), jnp.float32)],
        ),
        compiler_params=pltpu.CompilerParams(
            dimension_semantics=("parallel", "arbitrary"),
            vmem_limit_bytes=vmem_limit,
        ),
        cost_estimate=cost,
    )(x_t, t2, wi2)

    num = jnp.sum(partials[:, 0])
    den = jnp.sum(partials[:, 1])
    # den == 0 (all-zero weights) -> NaN, same behavior as PyTorch.
    return num / den


class CEWeightPallas:
    """JAX/Pallas port of the PyTorch CE_weight module (forward semantics)."""

    def __init__(self, cls_num_list, E1=200, E2=50, E=100):
        self.cls_num_list = list(cls_num_list)
        cls = jnp.asarray(self.cls_num_list, dtype=jnp.float32)
        w = 1.0 / cls
        self.weight = w / jnp.sum(w) * len(self.cls_num_list)
        self.E1 = int(E1)
        self.E2 = int(E2)
        self.E = int(E)

    def __call__(self, x, target, e, f1_score=(1, 1, 1, 1)):
        # Epoch-dependent per-class weight selection: host-side parameter glue,
        # mirrors the PyTorch branches exactly.
        C = len(self.cls_num_list)
        e = int(e)
        if e <= self.E1:
            per_cls_weights = jnp.ones((C,), dtype=jnp.float32)  # plain CE
        elif e > self.E1 and e <= self.E2:
            now_power = (e - self.E1) / (self.E2 - self.E1)
            per_cls_weights = jnp.power(self.weight, now_power).astype(jnp.float32)
        else:
            f1 = jnp.asarray(f1_score, dtype=jnp.float32)
            w = 1.0 / f1
            self.weight = w / jnp.sum(w) * len(self.cls_num_list)
            now_power = (e - self.E2) / (self.E - self.E2)
            per_cls_weights = jnp.power(self.weight, now_power).astype(jnp.float32)
        return weighted_cross_entropy(x, target, per_cls_weights)


if __name__ == "__main__":
    key = jax.random.PRNGKey(0)
    kx, kt = jax.random.split(key)

    # Small shapes consistent with the module (C = len(f1_score) = 4).
    N, C = 12, 4
    x = jax.random.normal(kx, (N, C), dtype=jnp.float32)
    target = jax.random.randint(kt, (N,), 0, C, dtype=jnp.int32)

    cls_num_list = [100, 50, 20, 10]
    loss_fn = CEWeightPallas(cls_num_list, E1=200, E2=50, E=100)

    # branch 1: e <= E1  -> plain cross-entropy
    loss_plain = loss_fn(x, target, e=100)
    # branch 3 (else): e > E1 and e > E2 -> f1-based per-class weights
    loss_f1 = loss_fn(x, target, e=300, f1_score=(0.9, 0.7, 0.5, 0.3))

    # Multi-tile / dual-group / bf16 path: forced tile_n=128 so the grid is
    # (2, 2) and the padded-column masking is exercised.
    N2 = 300
    kx2, kt2 = jax.random.split(jax.random.PRNGKey(1))
    x2 = jax.random.normal(kx2, (N2, C), dtype=jnp.bfloat16)
    t2 = jax.random.randint(kt2, (N2,), 0, C, dtype=jnp.int32)
    w2 = jnp.asarray([1.0, 2.0, 0.5, 1.5], jnp.float32)
    loss_multi = weighted_cross_entropy(x2, t2, w2, tile_n=128)

    jax.block_until_ready(loss_plain)
    jax.block_until_ready(loss_f1)
    jax.block_until_ready(loss_multi)

    # sanity check against a pure-JAX reference
    def ref_ce(x, t, w):
        logp = jax.nn.log_softmax(x.astype(jnp.float32), axis=-1)
        nll = -jnp.take_along_axis(logp, t[:, None], axis=-1)[:, 0]
        wi = w[t]
        return jnp.sum(wi * nll) / jnp.sum(wi)

    ref_plain = ref_ce(x, target, jnp.ones((C,), jnp.float32))
    f1 = jnp.asarray((0.9, 0.7, 0.5, 0.3), jnp.float32)
    wref = (1.0 / f1) / jnp.sum(1.0 / f1) * C
    wref = jnp.power(wref, (300 - 50) / (100 - 50)).astype(jnp.float32)
    ref_f1 = ref_ce(x, target, wref)
    ref_multi = ref_ce(x2, t2, w2)

    assert jnp.allclose(loss_plain, ref_plain, atol=1e-5), (loss_plain, ref_plain)
    assert jnp.allclose(loss_f1, ref_f1, atol=1e-5), (loss_f1, ref_f1)
    assert jnp.allclose(loss_multi, ref_multi, atol=2e-2, rtol=2e-2), (loss_multi, ref_multi)

    print("KERNEL_OK")
</pallas_src>

<mosaic_0001>
module attributes {stable_mosaic.version = 11 : i64} {
  func.func @_weighted_ce_kernel(%arg0: i32, %arg1: i32, %arg2: memref<4x128xf32, #tpu.memory_space<vmem>>, %arg3: memref<1x128xi32, #tpu.memory_space<vmem>>, %arg4: memref<1x128xf32, #tpu.memory_space<vmem>>, %arg5: memref<1x2xf32, #tpu.memory_space<smem>>, %arg6: memref<1x128xf32, #tpu.memory_space<vmem>>, %arg7: memref<1x128xf32, #tpu.memory_space<vmem>>) attributes {dimension_semantics = [#tpu.dimension_semantics<parallel>, #tpu.dimension_semantics<arbitrary>], iteration_bounds = array<i64: 1, 1>, scalar_prefetch = 0 : i64, scratch_operands = 2 : i64, tpu.core_type = #tpu.core_type<tc>, window_params = [{transform_indices = @transform_0, window_bounds = array<i64: 4, 128>}, {transform_indices = @transform_1, window_bounds = array<i64: 1, 128>}, {transform_indices = @transform_2, window_bounds = array<i64: 1, 128>}, {transform_indices = @transform_3, window_bounds = array<i64: 1, 2>}]} {
    %c0_i32 = arith.constant 0 : i32
    %0 = arith.cmpi eq, %arg1, %c0_i32 : i32
    %1 = arith.extui %0 : i1 to i32
    %c0_i32_0 = arith.constant 0 : i32
    %2 = arith.cmpi ne, %1, %c0_i32_0 : i32
    scf.if %2 {
      %cst_19 = arith.constant 0.000000e+00 : f32
      %33 = vector.broadcast %cst_19 : f32 to vector<1x128xf32>
      %c0_20 = arith.constant 0 : index
      %c0_21 = arith.constant 0 : index
      %34 = vector.load %arg6[%c0_20, %c0_21] : memref<1x128xf32, #tpu.memory_space<vmem>>, vector<1x128xf32>
      tpu.vector_store %arg6[%c0_20, %c0_21], %33 {strides = array<i32>} : memref<1x128xf32, #tpu.memory_space<vmem>>, vector<1x128xf32>,
      %cst_22 = arith.constant 0.000000e+00 : f32
      %35 = vector.broadcast %cst_22 : f32 to vector<1x128xf32>
      %c0_23 = arith.constant 0 : index
      %c0_24 = arith.constant 0 : index
      %36 = vector.load %arg7[%c0_23, %c0_24] : memref<1x128xf32, #tpu.memory_space<vmem>>, vector<1x128xf32>
      tpu.vector_store %arg7[%c0_23, %c0_24], %35 {strides = array<i32>} : memref<1x128xf32, #tpu.memory_space<vmem>>, vector<1x128xf32>,
    } else {
    }
    %c0 = arith.constant 0 : index
    %c0_1 = arith.constant 0 : index
    %3 = vector.load %arg2[%c0, %c0_1] : memref<4x128xf32, #tpu.memory_space<vmem>>, vector<4x128xf32>
    %c0_2 = arith.constant 0 : index
    %c0_3 = arith.constant 0 : index
    %4 = vector.load %arg3[%c0_2, %c0_3] : memref<1x128xi32, #tpu.memory_space<vmem>>, vector<1x128xi32>
    %c0_4 = arith.constant 0 : index
    %c0_5 = arith.constant 0 : index
    %5 = vector.load %arg4[%c0_4, %c0_5] : memref<1x128xf32, #tpu.memory_space<vmem>>, vector<1x128xf32>
    %6 = tpu.iota {dimensions = array<i32: 0>} : vector<4x128xi32>
    %7 = vector.broadcast %4 : vector<1x128xi32> to vector<4x128xi32>
    %8 = arith.cmpi eq, %6, %7 : vector<4x128xi32>
    %cst = arith.constant dense<0xFF800000> : vector<128xf32>
    %9 = vector.multi_reduction <maximumf>, %3, %cst [0] : vector<4x128xf32> to vector<128xf32>
    %10 = vector.shape_cast %9 : vector<128xf32> to vector<1x128xf32>
    %11 = vector.broadcast %10 : vector<1x128xf32> to vector<4x128xf32>
    %12 = arith.subf %3, %11 : vector<4x128xf32>
    %13 = math.exp %12 : vector<4x128xf32>
    %cst_6 = arith.constant dense<0.000000e+00> : vector<128xf32>
    %14 = vector.multi_reduction <add>, %13, %cst_6 [0] : vector<4x128xf32> to vector<128xf32>
    %15 = vector.shape_cast %14 : vector<128xf32> to vector<1x128xf32>
    %16 = math.log %15 : vector<1x128xf32>
    %17 = arith.addf %16, %10 : vector<1x128xf32>
    %cst_7 = arith.constant 0.000000e+00 : f32
    %18 = vector.broadcast %cst_7 : f32 to vector<4x128xf32>
    %19 = arith.select %8, %3, %18 : vector<4x128xi1>, vector<4x128xf32>
    %cst_8 = arith.constant dense<0.000000e+00> : vector<128xf32>
    %20 = vector.multi_reduction <add>, %19, %cst_8 [0] : vector<4x128xf32> to vector<128xf32>
    %21 = vector.shape_cast %20 : vector<128xf32> to vector<1x128xf32>
    %22 = arith.subf %17, %21 : vector<1x128xf32>
    %c0_9 = arith.constant 0 : index
    %c0_10 = arith.constant 0 : index
    %23 = vector.load %arg6[%c0_9, %c0_10] : memref<1x128xf32, #tpu.memory_space<vmem>>, vector<1x128xf32>
    %24 = arith.mulf %5, %22 : vector<1x128xf32>
    %25 = arith.addf %23, %24 : vector<1x128xf32>
    %c0_11 = arith.constant 0 : index
    %c0_12 = arith.constant 0 : index
    %26 = vector.load %arg6[%c0_11, %c0_12] : memref<1x128xf32, #tpu.memory_space<vmem>>, vector<1x128xf32>
    tpu.vector_store %arg6[%c0_11, %c0_12], %25 {strides = array<i32>} : memref<1x128xf32, #tpu.memory_space<vmem>>, vector<1x128xf32>,
    %c0_13 = arith.constant 0 : index
    %c0_14 = arith.constant 0 : index
    %27 = vector.load %arg7[%c0_13, %c0_14] : memref<1x128xf32, #tpu.memory_space<vmem>>, vector<1x128xf32>
    %28 = arith.addf %27, %5 : vector<1x128xf32>
    %c0_15 = arith.constant 0 : index
    %c0_16 = arith.constant 0 : index
    %29 = vector.load %arg7[%c0_15, %c0_16] : memref<1x128xf32, #tpu.memory_space<vmem>>, vector<1x128xf32>
    tpu.vector_store %arg7[%c0_15, %c0_16], %28 {strides = array<i32>} : memref<1x128xf32, #tpu.memory_space<vmem>>, vector<1x128xf32>,
    %c0_i32_17 = arith.constant 0 : i32
    %30 = arith.cmpi eq, %arg1, %c0_i32_17 : i32
    %31 = arith.extui %30 : i1 to i32
    %c0_i32_18 = arith.constant 0 : i32
    %32 = arith.cmpi ne, %31, %c0_i32_18 : i32
    scf.if %32 {
      %c0_19 = arith.constant 0 : index
      %c0_20 = arith.constant 0 : index
      %33 = vector.load %arg6[%c0_19, %c0_20] : memref<1x128xf32, #tpu.memory_space<vmem>>, vector<1x128xf32>
      %34 = vector.shape_cast %33 : vector<1x128xf32> to vector<1x1x128xf32>
      %cst_21 = arith.constant dense<0.000000e+00> : vector<1xf32>
      %35 = vector.multi_reduction <add>, %34, %cst_21 [1, 2] : vector<1x1x128xf32> to vector<1xf32>
      %36 = vector.shape_cast %35 : vector<1xf32> to vector<1x1x1xf32>
      %37 = vector.extract %36[0, 0, 0] : f32 from vector<1x1x1xf32>
      %c0_22 = arith.constant 0 : index
      %c0_23 = arith.constant 0 : index
      %38 = memref.load %arg5[%c0_22, %c0_23] : memref<1x2xf32, #tpu.memory_space<smem>>
      memref.store %37, %arg5[%c0_22, %c0_23] : memref<1x2xf32, #tpu.memory_space<smem>>
      %c0_24 = arith.constant 0 : index
      %c0_25 = arith.constant 0 : index
      %39 = vector.load %arg7[%c0_24, %c0_25] : memref<1x128xf32, #tpu.memory_space<vmem>>, vector<1x128xf32>
      %40 = vector.shape_cast %39 : vector<1x128xf32> to vector<1x1x128xf32>
      %cst_26 = arith.constant dense<0.000000e+00> : vector<1xf32>
      %41 = vector.multi_reduction <add>, %40, %cst_26 [1, 2] : vector<1x1x128xf32> to vector<1xf32>
      %42 = vector.shape_cast %41 : vector<1xf32> to vector<1x1x1xf32>
      %43 = vector.extract %42[0, 0, 0] : f32 from vector<1x1x1xf32>
      %c0_27 = arith.constant 0 : index
      %c1 = arith.constant 1 : index
      %44 = memref.load %arg5[%c0_27, %c1] : memref<1x2xf32, #tpu.memory_space<smem>>
      memref.store %43, %arg5[%c0_27, %c1] : memref<1x2xf32, #tpu.memory_space<smem>>
    } else {
    }
    return
  }
  func.func @transform_0(%arg0: i32, %arg1: i32) -> (i32, i32) {
    %c1_i32 = arith.constant 1 : i32
    %0 = arith.muli %arg0, %c1_i32 : i32
    %1 = arith.addi %0, %arg1 : i32
    %c0_i32 = arith.constant 0 : i32
    %c0_i32_0 = arith.constant 0 : i32
    return %c0_i32, %1 : i32, i32
  }
  func.func @transform_1(%arg0: i32, %arg1: i32) -> (i32, i32) {
    %c1_i32 = arith.constant 1 : i32
    %0 = arith.muli %arg0, %c1_i32 : i32
    %1 = arith.addi %0, %arg1 : i32
    %c0_i32 = arith.constant 0 : i32
    %c0_i32_0 = arith.constant 0 : i32
    return %c0_i32, %1 : i32, i32
  }
  func.func @transform_2(%arg0: i32, %arg1: i32) -> (i32, i32) {
    %c1_i32 = arith.constant 1 : i32
    %0 = arith.muli %arg0, %c1_i32 : i32
    %1 = arith.addi %0, %arg1 : i32
    %c0_i32 = arith.constant 0 : i32
    %c0_i32_0 = arith.constant 0 : i32
    return %c0_i32, %1 : i32, i32
  }
  func.func @transform_3(%arg0: i32, %arg1: i32) -> (i32, i32) {
    %c0_i32 = arith.constant 0 : i32
    %c0_i32_0 = arith.constant 0 : i32
    return %arg0, %c0_i32 : i32, i32
  }
}

</mosaic_0001>

<llo_original>
// kernel: weighted_cross_entropy.1
$region0: #{weighted_cross_entropy.1}
  #allocation0 [shape = 'u32[]', space=smem, size = 0x4, offset = 0x4, fixed_abs, tag = 'smem constant byte address 0x4 - core index']
  #allocation1 [shape = 'u32[72,128]{1,0:T(1,128)}', space=vmem, size = 0x9000, scoped, tag = 'internal scratch']
  #allocation2 [shape = 'f32[1,128]{1,0:T(1,128)}', space=vmem, size = 0x200, scoped, tag = 'scratch operand']
  #allocation3 [shape = 'f32[1,128]{1,0:T(1,128)}', space=vmem, size = 0x200, scoped, tag = 'scratch operand']
  %s0 = inlined_call_operand.vmem [shape: f32[4,128], index: 0, kind: input, shape index: {}]
  %s1 = inlined_call_operand.vmem [shape: s32[1,128], index: 1, kind: input, shape index: {}]
  %s2 = inlined_call_operand.vmem [shape: f32[1,128], index: 2, kind: input, shape index: {}]
  %s3 = inlined_call_operand.vmem [shape: f32[1,2], index: 3, kind: output, shape index: {}]
  %s4 = sld [smem:[#allocation0]]
  $region30: #{weighted_cross_entropy.1} parent=0
    _
  %s6 = ssub.s32 1, %s4
  %s7 = scalar_select 0, %s6, %s4
  $region1: #{weighted_cross_entropy.1} parent=0
    #allocation4 [shape = 'u8[512]{0}', space=smem, size = 0x200, scoped, tag = 'output window, operand 0, single buffered']
    #allocation5 [shape = 's32[1]{0}', space=sflag, size = 0x4, scoped, tag = 'scoped memory for weighted_cross_entropy.1']
    %8 = vsyncpa [#allocation5], 0
    // Predicated region
    $region2: #{weighted_cross_entropy.1} parent=1 // pred_check
      _
    $region3: #{weighted_cross_entropy.1} parent=1 // pred_check_branch
      %10 = sbr.rel (0) target = $region5
    $region4: #{weighted_cross_entropy.1} parent=1 // pred_region
      %s11 = sadd.s32 0, 0
      %p12 = scmp.lt.s32.totalorder %s11, 0
      %s13 = scalar_select %p12, %s11, 0
      %s14 = smul.addr %s13, 4
      %s15 = scalar_lea.vmem %s0, %s14
      %s16 = sadd.s32 0, 0
    $region5: #{weighted_cross_entropy.1} parent=1 // pred_fallthru
      _
    // Predicated region
    $region6: #{weighted_cross_entropy.1} parent=1 // pred_check
      _
    $region7: #{weighted_cross_entropy.1} parent=1 // pred_check_branch
      %18 = sbr.rel (0) target = $region9
    $region8: #{weighted_cross_entropy.1} parent=1 // pred_region
      %s19 = sadd.s32 0, 0
      %p20 = scmp.lt.s32.totalorder %s19, 0
      %s21 = scalar_select %p20, %s19, 0
      %s22 = scalar_lea.vmem %s1, %s21
      %s23 = sadd.s32 0, 0
    $region9: #{weighted_cross_entropy.1} parent=1 // pred_fallthru
      _
    // Predicated region
    $region10: #{weighted_cross_entropy.1} parent=1 // pred_check
      _
    $region11: #{weighted_cross_entropy.1} parent=1 // pred_check_branch
      %25 = sbr.rel (0) target = $region13
    $region12: #{weighted_cross_entropy.1} parent=1 // pred_region
      %s26 = sadd.s32 0, 0
      %p27 = scmp.lt.s32.totalorder %s26, 0
      %s28 = scalar_select %p27, %s26, 0
      %s29 = scalar_lea.vmem %s2, %s28
      %s30 = sadd.s32 0, 0
    $region13: #{weighted_cross_entropy.1} parent=1 // pred_fallthru
      _
    %s31 = sadd.s32 0, 0
    %p32 = scmp.lt.s32.totalorder %s31, 0
    %s33 = scalar_select %p32, %s31, 0
    %s34 = smul.addr %s33, 4
    %s35 = scalar_lea.vmem %s0, %s34
    %s36 = sadd.s32 0, 0
    %p37 = scmp.lt.s32.totalorder %s36, 0
    %s38 = scalar_select %p37, %s36, 0
    %s39 = scalar_lea.vmem %s1, %s38
    %s40 = sadd.s32 0, 0
    %p41 = scmp.lt.s32.totalorder %s40, 0
    %s42 = scalar_select %p41, %s40, 0
    %s43 = scalar_lea.vmem %s2, %s42
    %s44 = sadd.s32 0, 0
    %p45 = scmp.lt.s32.totalorder %s44, 0
    %s46 = scalar_select %p45, %s44, 0
    %s47 = smul.addr %s46, 4
    %s48 = scalar_lea.vmem %s0, %s47
    %s49 = sadd.s32 0, 0
    %s50 = sadd.s32 0, 0
    %p51 = scmp.lt.s32.totalorder %s50, 0
    %s52 = scalar_select %p51, %s50, 0
    %s53 = scalar_lea.vmem %s1, %s52
    %s54 = sadd.s32 0, 0
    %s55 = sadd.s32 0, 0
    %p56 = scmp.lt.s32.totalorder %s55, 0
    %s57 = scalar_select %p56, %s55, 0
    %s58 = scalar_lea.vmem %s2, %s57
    %s59 = sadd.s32 0, 0
    %p60 = scmp.eq.s32.totalorder 0, 0
    // Predicated region
    $region14: #{weighted_cross_entropy.1} parent=1 // pred_check
      %p61 = pneg %p60
    $region15: #{weighted_cross_entropy.1} parent=1 // pred_check_branch
      %63 = sbr.rel (%p61) target = $region17
    $region16: #{weighted_cross_entropy.1} parent=1 // pred_region
      %64 = vst [vmem:[#allocation2] sm:$0x1] 0.0
      %65 = vst [vmem:[#allocation3] sm:$0x1] 0.0
    $region17: #{weighted_cross_entropy.1} parent=1 // pred_fallthru
      _
    %v66 = vld [vmem:[%s48] sm:$0xf]
    %v67 = vld [vmem:[%s53] sm:$0x1]
    %v68 = vld [vmem:[%s58] sm:$0x1]
    %v69 = vlaneseq
    %v70 = vshrl.u32 %v69, 7
    %v71 = vperm.slane %v67, 0
    %vm72 = vcmp.eq.s32.totalorder %v70, %v71
    %vm73 = vcmask 1043456
    %v74 = vsel %vm73, %v66, -inf
    %v75 = vrot.slane %v74, 4
    %v76 = vmax.f32 %v74, %v75
    %v77 = vrot.slane %v76, 2
    %v78 = vmax.f32 %v76, %v77
    %v79 = vrot.slane %v78, 1
    %v80 = vmax.f32 %v78, %v79
    %v81 = vsub.f32 %v66, %v80
    %v82 = vmul.f32 %v81, 1.442695
    %v83 = vpow.pop %v82
    %v84 = vsel %vm73, %v83, 0.0
    %v85 = vrot.slane %v84, 4
    %v86 = vadd.f32 %v84, %v85
    %v87 = vrot.slane %v86, 2
    %v88 = vadd.f32 %v86, %v87
    %v89 = vrot.slane %v88, 1
    %v90 = vadd.f32 %v88, %v89
    %v91 = vlog2.pop %v90
    %v92 = vmul.f32 %v91, 0.6931472
    %v93 = vadd.f32 %v92, %v80
    %v94 = vsel %vm72, %v66, 0.0
    %v95 = vsel %vm73, %v94, 0.0
    %v96 = vrot.slane %v95, 4
    %v97 = vadd.f32 %v95, %v96
    %v98 = vrot.slane %v97, 2
    %v99 = vadd.f32 %v97, %v98
    %v100 = vrot.slane %v99, 1
    %v101 = vadd.f32 %v99, %v100
    %v102 = vsub.f32 %v93, %v101
    %v103 = vld [vmem:[#allocation2] sm:$0x1]
    %v104 = vmul.f32 %v68, %v102
    %v105 = vadd.f32 %v103, %v104
    %106 = vst [vmem:[#allocation2] sm:$0x1] %v105
    %v107 = vld [vmem:[#allocation3] sm:$0x1]
    %v108 = vadd.f32 %v107, %v68
    %109 = vst [vmem:[#allocation3] sm:$0x1] %v108
    // Predicated region
    $region18: #{weighted_cross_entropy.1} parent=1 // pred_check
      %p110 = pneg %p60
    $region19: #{weighted_cross_entropy.1} parent=1 // pred_check_branch
      %112 = sbr.rel (%p110) target = $region21
    $region20: #{weighted_cross_entropy.1} parent=1 // pred_region
      %v113 = vld [vmem:[#allocation2] sm:$0x1]
      %vm114 = vcmask 1040384
      %v115 = vsel %vm114, %v113, 0.0
      %116 = vadd.xlane.f32.xlu0 %v115
      %v117 = vpop.xlane.xlu0 %116
      %v118 = vrot.slane %v117, 4
      %v119 = vadd.f32 %v117, %v118
      %v120 = vrot.slane %v119, 2
      %v121 = vadd.f32 %v119, %v120
      %v122 = vrot.slane %v121, 1
      %v123 = vadd.f32 %v121, %v122
      %s124 = vtos %v123
      %s125 = scalar_lea.smem [#allocation4], 0
      %126 = sst [smem:[%s125]] %s124
      %v127 = vld [vmem:[#allocation3] sm:$0x1]
      %v128 = vsel %vm114, %v127, 0.0
      %129 = vadd.xlane.f32.xlu0 %v128
      %v130 = vpop.xlane.xlu0 %129
      %v131 = vrot.slane %v130, 4
      %v132 = vadd.f32 %v130, %v131
      %v133 = vrot.slane %v132, 2
      %v134 = vadd.f32 %v132, %v133
      %v135 = vrot.slane %v134, 1
      %v136 = vadd.f32 %v134, %v135
      %s137 = vtos %v136
      %s138 = scalar_lea.smem [#allocation4], 1
      %139 = sst [smem:[%s138]] %s137
    $region21: #{weighted_cross_entropy.1} parent=1 // pred_fallthru
      _
    // Predicated region
    $region22: #{weighted_cross_entropy.1} parent=1 // pred_check
      _
    $region23: #{weighted_cross_entropy.1} parent=1 // pred_check_branch
      %141 = sbr.rel (0) target = $region25
    $region24: #{weighted_cross_entropy.1} parent=1 // pred_region
      %143 = vsyncadd [#allocation5], 0
      %s145 = sshll.u32 %s3, 4
      %s146 = int_to_ptr.vmem [resolvable:$true] %s145
      %148 = dma.smem_to_vmem [#allocation4], 16, %s146, [#allocation5]
    $region25: #{weighted_cross_entropy.1} parent=1 // pred_fallthru
      _
    // Predicated region
    $region26: #{weighted_cross_entropy.1} parent=1 // pred_check
      _
    $region27: #{weighted_cross_entropy.1} parent=1 // pred_check_branch
      %150 = sbr.rel (0) target = $region29
    $region28: #{weighted_cross_entropy.1} parent=1 // pred_region
      %152 = dma.done [#allocation5], 16
    $region29: #{weighted_cross_entropy.1} parent=1 // pred_fallthru
      _
    %153 = sfence
    %154 = vsyncpa [#allocation5], 1

</llo_original>
